<compile_context>
chip_gen: v7x
topology: tpu7x:2x2x1
jax: 0.10.0
libtpu: 0.0.40
codegen_flags: <defaults>
</compile_context>

<pallas_src>
import math
import functools

import jax
import jax.numpy as jnp
from jax.experimental import pallas as pl
from jax.experimental.pallas import tpu as pltpu

LANE = 128          # TPU lane width
SUB_F32 = 8         # f32 sublane count
ROW_ALIGN = 16      # bf16 packs 2 rows/32-bit word and tiles (16,128): keep bf16 slices 16-aligned
BIAS_ROWS = 8       # rows reserved per bias segment in the f32 bias buffer (8-row alignment)


def _round_up(x, m):
    return (x + m - 1) // m * m


# ----------------------------- Pallas kernel -----------------------------

def actor_mlp_kernel(x_ref, w_ref, b_ref, out_ref, *,
                     n_input, in_rows, f_pad, out_pad, n_output):
    """One batch tile of a = relu(relu(x@W1+b1)@W2+b2)@W3+b3.

    x_ref  : (TB, n_input)            f32, batch-tiled (true input width, no 128-lane slab)
    w_ref  : (in_rows+2*f_pad, W)     bf16, packed [w1; w2; w3], VMEM-resident across the grid
    b_ref  : (3*BIAS_ROWS, W)         f32,  packed [b1; b2; b3] (row 0 of each segment valid)
    out_ref: (TB, n_output)           f32, true output width (narrow store, 32x fewer HBM bytes)
    All offsets are static -> zero-cost ref slices.
    """
    o_w1 = 0
    o_w2 = o_w1 + in_rows
    o_w3 = o_w2 + f_pad

    x = x_ref[...].astype(jnp.bfloat16)                        # (TB, n_input)
    if n_input < in_rows:                                      # static branch: pad K to packed rows
        x = jnp.concatenate(
            [x, jnp.zeros((x.shape[0], in_rows - n_input), jnp.bfloat16)], axis=1)

    w1 = w_ref[o_w1:o_w1 + in_rows, :f_pad]                    # bf16 (in_rows, f_pad)
    b1 = b_ref[0:1, :f_pad]                                    # f32  (1, f_pad)
    h1 = jnp.dot(x, w1, preferred_element_type=jnp.float32) + b1
    h1 = jnp.maximum(h1, 0.0)                                  # ReLU in f32

    w2 = w_ref[o_w2:o_w2 + f_pad, :f_pad]
    b2 = b_ref[BIAS_ROWS:BIAS_ROWS + 1, :f_pad]
    h2 = jnp.dot(h1.astype(jnp.bfloat16), w2, preferred_element_type=jnp.float32) + b2
    h2 = jnp.maximum(h2, 0.0)

    w3 = w_ref[o_w3:o_w3 + f_pad, :out_pad]
    b3 = b_ref[2 * BIAS_ROWS:2 * BIAS_ROWS + 1, :out_pad]
    a = jnp.dot(h2.astype(jnp.bfloat16), w3, preferred_element_type=jnp.float32) + b3

    # Padded feature/output lanes are exactly zero (zero-padded weights/biases), so slicing to
    # the true n_output lanes is exact; narrow (masked) store <-> 128/n_output fewer HBM bytes.
    out_ref[...] = a[:, :n_output].astype(out_ref.dtype)


# -------------------------- parameter packing (one-time) --------------------------

def pack_actor_params(params, n_input, n_features, n_output):
    """Pack weights (bf16, lane-dense) and biases (f32) into two grid-invariant buffers."""
    in_rows = _round_up(max(n_input, 1), ROW_ALIGN)
    f_pad = _round_up(max(n_features, 1), LANE)
    out_pad = _round_up(max(n_output, 1), LANE)
    width = max(f_pad, out_pad)

    def pad2(a, rows, cols):
        a = jnp.asarray(a, jnp.float32)
        return jnp.zeros((rows, cols), jnp.float32).at[:a.shape[0], :a.shape[1]].set(a)

    w_packed = jnp.concatenate(
        [pad2(params["w1"], in_rows, width),
         pad2(params["w2"], f_pad, width),
         pad2(params["w3"], f_pad, width)], axis=0).astype(jnp.bfloat16)

    b_packed = jnp.concatenate(
        [pad2(params["b1"], BIAS_ROWS, width),
         pad2(params["b2"], BIAS_ROWS, width),
         pad2(params["b3"], BIAS_ROWS, width)], axis=0)        # stays f32

    meta = dict(n_input=n_input, n_features=n_features, n_output=n_output,
                in_rows=in_rows, f_pad=f_pad, out_pad=out_pad, width=width)
    return w_packed, b_packed, meta


# ----------------------------- batch tile selection -----------------------------

def _choose_batch_tile(B):
    # Power-of-two buckets (no recompile churn for variable RL batches).
    # For B > 256 we always produce >= 2 grid tiles so v7x's two TensorCores share the
    # "parallel" batch axis; cap at 512 rows (mem-bound sweet spot, tiny VMEM cost).
    if B <= 256:
        return max(SUB_F32, pl.next_power_of_2(B))
    if B <= 1024:
        return 256
    return 512


# ----------------------------- forward wrapper -----------------------------

def actor_forward(state, w_packed, b_packed, meta):
    """Forward pass of ActorNetwork.

    state: (B, 1, n_input) or (B, n_input) array.
    w_packed/b_packed/meta: output of pack_actor_params.
    Returns (B, n_output) float32.
    """
    n_input, n_output = meta["n_input"], meta["n_output"]
    in_rows, f_pad, out_pad = meta["in_rows"], meta["f_pad"], meta["out_pad"]

    # glue: torch.squeeze(state, 1).float()
    if state.ndim == 3 and state.shape[1] == 1:
        x = jnp.squeeze(state, axis=1)
    else:
        x = state
    x = x.astype(jnp.float32)
    B = x.shape[0]

    tb = _choose_batch_tile(B)
    b_pad = _round_up(B, tb)
    if b_pad != B:
        x = jnp.pad(x, ((0, b_pad - B), (0, 0)))   # row-only padding; no lane padding in HBM

    kernel = functools.partial(actor_mlp_kernel, n_input=n_input, in_rows=in_rows,
                               f_pad=f_pad, out_pad=out_pad, n_output=n_output)

    w_rows, w_cols = w_packed.shape
    b_rows, b_cols = b_packed.shape
    grid = (b_pad // tb,)

    w_bytes = w_packed.size * 2
    bias_bytes = b_packed.size * 4
    x_bytes = b_pad * n_input * 4
    o_bytes = b_pad * n_output * 4
    flops = 2 * b_pad * (in_rows * f_pad + f_pad * f_pad + f_pad * out_pad)

    # Explicit VMEM budget: 2x(x tile) + 2x(out tile) + 2x(param buffers) + h1/h2/a intermediates.
    vmem_est = (2 * tb * n_input * 4 + 2 * tb * n_output * 4
                + 2 * (w_bytes + bias_bytes) + 4 * tb * meta["width"] * 4)
    vmem_limit = int(min(max(2 * vmem_est, 32 * 2**20), 48 * 2**20))  # fits v7x's 64 MiB physical

    out = pl.pallas_call(
        kernel,
        out_shape=jax.ShapeDtypeStruct((b_pad, n_output), jnp.float32),
        grid=grid,
        in_specs=[
            pl.BlockSpec((tb, n_input), lambda i: (i, 0)),     # true-width input tiles
            pl.BlockSpec((w_rows, w_cols), lambda i: (0, 0)),  # bf16 weights, VMEM-resident
            pl.BlockSpec((b_rows, b_cols), lambda i: (0, 0)),  # f32 biases, VMEM-resident
        ],
        out_specs=pl.BlockSpec((tb, n_output), lambda i: (i, 0)),  # true-width output tiles
        compiler_params=pltpu.CompilerParams(
            dimension_semantics=("parallel",),                 # batch tiles shard over v7x's 2 TCs
            vmem_limit_bytes=vmem_limit,
        ),
        cost_estimate=pl.CostEstimate(
            flops=flops, transcendentals=0,
            bytes_accessed=x_bytes + w_bytes + bias_bytes + o_bytes),
    )(x, w_packed, b_packed)

    return out if b_pad == B else out[:B]


# ------------------------ deterministic parameter init ------------------------

def xavier_uniform(key, fan_in, fan_out, gain):
    # matches torch.nn.init.xavier_uniform_; stored as (in, out) so the kernel does x @ W
    limit = gain * math.sqrt(6.0 / (fan_in + fan_out))
    return jax.random.uniform(key, (fan_in, fan_out), jnp.float32, -limit, limit)


def linear_bias_init(key, fan_in, fan_out):
    # torch.nn.Linear default bias init: U(-1/sqrt(fan_in), 1/sqrt(fan_in))
    bound = 1.0 / math.sqrt(fan_in)
    return jax.random.uniform(key, (1, fan_out), jnp.float32, -bound, bound)


def init_actor_params(key, n_input, n_features, n_output):
    gain_relu = math.sqrt(2.0)   # nn.init.calculate_gain('relu')
    gain_lin = 1.0               # nn.init.calculate_gain('linear')
    k = jax.random.split(key, 6)
    return {
        "w1": xavier_uniform(k[0], n_input, n_features, gain_relu),
        "b1": linear_bias_init(k[1], n_input, n_features),
        "w2": xavier_uniform(k[2], n_features, n_features, gain_relu),
        "b2": linear_bias_init(k[3], n_features, n_features),
        "w3": xavier_uniform(k[4], n_features, n_output, gain_lin),
        "b3": linear_bias_init(k[5], n_features, n_output),
    }


# ----------------------------------- main -----------------------------------

if __name__ == "__main__":
    key = jax.random.PRNGKey(0)
    k_param, k_state = jax.random.split(key)

    B, n_input, n_features, n_output = 8, 16, 32, 4

    params = init_actor_params(k_param, n_input, n_features, n_output)
    w_packed, b_packed, meta = pack_actor_params(params, n_input, n_features, n_output)

    # state shaped (B, 1, n_input) like mushroom-rl passes it (squeeze(dim=1) in forward)
    state = jax.random.normal(k_state, (B, 1, n_input), jnp.float32)

    out = actor_forward(state, w_packed, b_packed, meta)
    out = jax.block_until_ready(out)

    # pure-JAX f32 reference against the un-quantized parameters (kernel weights are bf16,
    # f32 accumulation -> loosened tolerance)
    x = jnp.squeeze(state, 1)
    h1 = jnp.maximum(x @ params["w1"] + params["b1"], 0.0)
    h2 = jnp.maximum(h1 @ params["w2"] + params["b2"], 0.0)
    ref = h2 @ params["w3"] + params["b3"]

    assert out.shape == (B, n_output)
    assert jnp.allclose(out, ref, atol=5e-2, rtol=5e-2), float(jnp.max(jnp.abs(out - ref)))

    print("KERNEL_OK")
</pallas_src>

<mosaic_0001>
module attributes {stable_mosaic.version = 11 : i64} {
  func.func @actor_mlp_kernel(%arg0: i32, %arg1: memref<8x16xf32, #tpu.memory_space<vmem>>, %arg2: memref<272x128xbf16, #tpu.memory_space<vmem>>, %arg3: memref<24x128xf32, #tpu.memory_space<vmem>>, %arg4: memref<8x4xf32, #tpu.memory_space<vmem>>) attributes {dimension_semantics = [#tpu.dimension_semantics<parallel>], iteration_bounds = array<i64: 1>, scalar_prefetch = 0 : i64, scratch_operands = 0 : i64, tpu.core_type = #tpu.core_type<tc>, window_params = [{transform_indices = @transform_0, window_bounds = array<i64: 8, 16>}, {pipeline_mode = #tpu.pipeline_mode<synchronous>, transform_indices = @transform_1, window_bounds = array<i64: 272, 128>}, {pipeline_mode = #tpu.pipeline_mode<synchronous>, transform_indices = @transform_2, window_bounds = array<i64: 24, 128>}, {transform_indices = @transform_3, window_bounds = array<i64: 8, 4>}]} {
    %c0 = arith.constant 0 : index
    %c0_0 = arith.constant 0 : index
    %0 = vector.load %arg1[%c0, %c0_0] : memref<8x16xf32, #tpu.memory_space<vmem>>, vector<8x16xf32>
    %1 = arith.truncf %0 : vector<8x16xf32> to vector<8x16xbf16>
    %c0_1 = arith.constant 0 : index
    %c0_2 = arith.constant 0 : index
    %2 = vector.load %arg2[%c0_1, %c0_2] : memref<272x128xbf16, #tpu.memory_space<vmem>>, vector<16x128xbf16>
    %c0_3 = arith.constant 0 : index
    %c0_4 = arith.constant 0 : index
    %3 = vector.load %arg3[%c0_3, %c0_4] : memref<24x128xf32, #tpu.memory_space<vmem>>, vector<1x128xf32>
    %cst = arith.constant dense<0.000000e+00> : vector<8x128xf32>
    %4 = tpu.matmul %1, %2, %cst {dimension_numbers = #tpu.dot_dimension_numbers<[1], [0], [0], [1], [0, 0, 1, 1], [], []>} : vector<8x16xbf16>, vector<16x128xbf16>, vector<8x128xf32> -> vector<8x128xf32>
    %5 = vector.broadcast %3 : vector<1x128xf32> to vector<8x128xf32>
    %6 = arith.addf %4, %5 : vector<8x128xf32>
    %cst_5 = arith.constant 0.000000e+00 : f32
    %7 = vector.broadcast %cst_5 : f32 to vector<8x128xf32>
    %8 = arith.maximumf %6, %7 : vector<8x128xf32>
    %c16 = arith.constant 16 : index
    %c0_6 = arith.constant 0 : index
    %9 = vector.load %arg2[%c16, %c0_6] : memref<272x128xbf16, #tpu.memory_space<vmem>>, vector<128x128xbf16>
    %c8 = arith.constant 8 : index
    %c0_7 = arith.constant 0 : index
    %10 = vector.load %arg3[%c8, %c0_7] : memref<24x128xf32, #tpu.memory_space<vmem>>, vector<1x128xf32>
    %11 = arith.truncf %8 : vector<8x128xf32> to vector<8x128xbf16>
    %cst_8 = arith.constant dense<0.000000e+00> : vector<8x128xf32>
    %12 = tpu.matmul %11, %9, %cst_8 {dimension_numbers = #tpu.dot_dimension_numbers<[1], [0], [0], [1], [0, 0, 1, 1], [], []>} : vector<8x128xbf16>, vector<128x128xbf16>, vector<8x128xf32> -> vector<8x128xf32>
    %13 = vector.broadcast %10 : vector<1x128xf32> to vector<8x128xf32>
    %14 = arith.addf %12, %13 : vector<8x128xf32>
    %cst_9 = arith.constant 0.000000e+00 : f32
    %15 = vector.broadcast %cst_9 : f32 to vector<8x128xf32>
    %16 = arith.maximumf %14, %15 : vector<8x128xf32>
    %c144 = arith.constant 144 : index
    %c0_10 = arith.constant 0 : index
    %17 = vector.load %arg2[%c144, %c0_10] : memref<272x128xbf16, #tpu.memory_space<vmem>>, vector<128x128xbf16>
    %c16_11 = arith.constant 16 : index
    %c0_12 = arith.constant 0 : index
    %18 = vector.load %arg3[%c16_11, %c0_12] : memref<24x128xf32, #tpu.memory_space<vmem>>, vector<1x128xf32>
    %19 = arith.truncf %16 : vector<8x128xf32> to vector<8x128xbf16>
    %cst_13 = arith.constant dense<0.000000e+00> : vector<8x128xf32>
    %20 = tpu.matmul %19, %17, %cst_13 {dimension_numbers = #tpu.dot_dimension_numbers<[1], [0], [0], [1], [0, 0, 1, 1], [], []>} : vector<8x128xbf16>, vector<128x128xbf16>, vector<8x128xf32> -> vector<8x128xf32>
    %21 = vector.broadcast %18 : vector<1x128xf32> to vector<8x128xf32>
    %22 = arith.addf %20, %21 : vector<8x128xf32>
    %23 = vector.extract_strided_slice %22 {offsets = [0, 0], sizes = [8, 4], strides = [1, 1]} : vector<8x128xf32> to vector<8x4xf32>
    %c0_14 = arith.constant 0 : index
    %c0_15 = arith.constant 0 : index
    %24 = vector.load %arg4[%c0_14, %c0_15] : memref<8x4xf32, #tpu.memory_space<vmem>>, vector<8x4xf32>
    tpu.vector_store %arg4[%c0_14, %c0_15], %23 {strides = array<i32>} : memref<8x4xf32, #tpu.memory_space<vmem>>, vector<8x4xf32>,
    return
  }
  func.func @transform_0(%arg0: i32) -> (i32, i32) {
    %c0_i32 = arith.constant 0 : i32
    %c0_i32_0 = arith.constant 0 : i32
    return %arg0, %c0_i32 : i32, i32
  }
  func.func @transform_1(%arg0: i32) -> (i32, i32) {
    %c0_i32 = arith.constant 0 : i32
    %c0_i32_0 = arith.constant 0 : i32
    %c0_i32_1 = arith.constant 0 : i32
    return %c0_i32, %c0_i32_0 : i32, i32
  }
  func.func @transform_2(%arg0: i32) -> (i32, i32) {
    %c0_i32 = arith.constant 0 : i32
    %c0_i32_0 = arith.constant 0 : i32
    %c0_i32_1 = arith.constant 0 : i32
    return %c0_i32, %c0_i32_0 : i32, i32
  }
  func.func @transform_3(%arg0: i32) -> (i32, i32) {
    %c0_i32 = arith.constant 0 : i32
    %c0_i32_0 = arith.constant 0 : i32
    return %arg0, %c0_i32 : i32, i32
  }
}

</mosaic_0001>

<llo_original>
// kernel: tpu_custom_call.1
$region0: #{tpu_custom_call.1}
  #allocation0 [shape = 'u32[]', space=smem, size = 0x4, offset = 0x4, fixed_abs, tag = 'smem constant byte address 0x4 - core index']
  #allocation1 [shape = 'u32[144,128]{1,0:T(1,128)}', space=vmem, size = 0x12000, scoped, tag = 'internal scratch']
  %s0 = inlined_call_operand.hbm [shape: f32[8,16], index: 0, kind: input, shape index: {}]
  %s1 = inlined_call_operand.hbm [shape: bf16[272,128], index: 1, kind: input, shape index: {}]
  %s2 = inlined_call_operand.hbm [shape: f32[24,128], index: 2, kind: input, shape index: {}]
  %s3 = inlined_call_operand.vmem [shape: f32[8,4], index: 3, kind: output, shape index: {}]
  %s4 = sld [smem:[#allocation0]]
  $region34: #{tpu_custom_call.1} parent=0
    _
  %s6 = ssub.s32 1, %s4
  %s7 = scalar_select 0, %s6, %s4
  $region1: #{tpu_custom_call.1} parent=0
    #allocation2 [shape = 'u8[4096]{0}', space=vmem, size = 0x1000, scoped, tag = 'input window, operand 0, single buffered']
    #allocation3 [shape = 's32[1]{0}', space=sflag, size = 0x4, scoped, tag = 'scoped memory for tpu_custom_call.1']
    #allocation4 [shape = 'u8[69632]{0}', space=vmem, size = 0x11000, scoped, tag = 'input window, operand 1, single buffered']
    #allocation5 [shape = 's32[1]{0}', space=sflag, size = 0x4, scoped, tag = 'scoped memory for tpu_custom_call.1']
    #allocation6 [shape = 'u8[12288]{0}', space=vmem, size = 0x3000, scoped, tag = 'input window, operand 2, single buffered']
    %8 = vsyncpa [#allocation3], 0
    %9 = vsyncpa [#allocation5], 0
    // Predicated region
    $region2: #{tpu_custom_call.1} parent=1 // pred_check
      _
    $region3: #{tpu_custom_call.1} parent=1 // pred_check_branch
      %11 = sbr.rel (0) target = $region5
    $region4: #{tpu_custom_call.1} parent=1 // pred_region
      %s13 = ssub.s32 128, 128
      %14 = vsyncadd [#allocation3], %s13
      %s16 = sshll.u32 [#allocation2], 4
      %s17 = int_to_ptr.vmem [resolvable:$true] %s16
      %19 = dma.hbm_to_vmem [thread:$0]  %s0, 128, %s17, [#allocation3]
    $region5: #{tpu_custom_call.1} parent=1 // pred_fallthru
      _
    // Predicated region
    $region6: #{tpu_custom_call.1} parent=1 // pred_check
      _
    $region7: #{tpu_custom_call.1} parent=1 // pred_check_branch
      %21 = sbr.rel (0) target = $region9
    $region8: #{tpu_custom_call.1} parent=1 // pred_region
      %s23 = ssub.s32 2176, 2176
      %24 = vsyncadd [#allocation5], %s23
      %s25 = sshll.u32 [#allocation4], 4
      %s26 = int_to_ptr.vmem [resolvable:$true] %s25
      %31 = dma.hbm_to_vmem [thread:$0]  %s1, 2176, %s26, [#allocation5], 64, 64, 4
    $region9: #{tpu_custom_call.1} parent=1 // pred_fallthru
      _
    // Predicated region
    $region10: #{tpu_custom_call.1} parent=1 // pred_check
      _
    $region11: #{tpu_custom_call.1} parent=1 // pred_check_branch
      %33 = sbr.rel (0) target = $region13
    $region12: #{tpu_custom_call.1} parent=1 // pred_region
      %s35 = ssub.s32 384, 384
      %36 = vsyncadd [#allocation5], %s35
      %s37 = sshll.u32 [#allocation6], 4
      %s38 = int_to_ptr.vmem [resolvable:$true] %s37
      %43 = dma.hbm_to_vmem [thread:$0]  %s2, 384, %s38, [#allocation5], 128, 128, 8
    $region13: #{tpu_custom_call.1} parent=1 // pred_fallthru
      _
    // Predicated region
    $region14: #{tpu_custom_call.1} parent=1 // pred_check
      _
    $region15: #{tpu_custom_call.1} parent=1 // pred_check_branch
      %45 = sbr.rel (0) target = $region17
    $region16: #{tpu_custom_call.1} parent=1 // pred_region
      %46 = dma.done [#allocation3], 128
    $region17: #{tpu_custom_call.1} parent=1 // pred_fallthru
      _
    // Predicated region
    $region18: #{tpu_custom_call.1} parent=1 // pred_check
      _
    $region19: #{tpu_custom_call.1} parent=1 // pred_check_branch
      %48 = sbr.rel (0) target = $region21
    $region20: #{tpu_custom_call.1} parent=1 // pred_region
      %49 = dma.done [#allocation5], 2176
    $region21: #{tpu_custom_call.1} parent=1 // pred_fallthru
      _
    // Predicated region
    $region22: #{tpu_custom_call.1} parent=1 // pred_check
      _
    $region23: #{tpu_custom_call.1} parent=1 // pred_check_branch
      %51 = sbr.rel (0) target = $region25
    $region24: #{tpu_custom_call.1} parent=1 // pred_region
      %52 = dma.done [#allocation5], 384
    $region25: #{tpu_custom_call.1} parent=1 // pred_fallthru
      _
    %v54 = vld [vmem:[#allocation2] sm:$0xff]
    %v55 = vpack.c.bf16 %v54, %v54
    %v56 = vld [vmem:[#allocation4] sm:$0xf]
    %v57 = vld [vmem:[#allocation4 + $0x4] sm:$0xf]
    %v58 = vld [vmem:[#allocation6] sm:$0x1]
    %v59 = vlaneseq
    %v60 = vshrl.u32 %v59, 7
    %v61 = vsub.s32 0, %v60
    %v62 = vrot.slane %v58, %v61
    %v65 = vunpack.c.l.b16 %v56
    %v66 = vunpack.c.l.b16 %v57
    %v67 = vpack.c.b16 %v66, %v65
    %vm69 = vcmask 130048
    %v71 = vsel %vm69, %v55, 0
    %73 = vmatprep.subr.bf16.mxu0 0
    %74 = vmatpush1.bf16.msra.mxu0 %v67
    %75 = vmatprep.subr.bf16.mxu0 0
    %76 = vmatpush1.bf16.msra.mxu0 0
    %77 = vmatprep.subr.bf16.mxu0 0
    %78 = vmatpush1.bf16.msra.mxu0 0
    %79 = vmatprep.subr.bf16.mxu0 0
    %80 = vmatpush1.bf16.msra.mxu0 0
    %81 = vmatprep.subr.bf16.mxu0 0
    %82 = vmatpush1.bf16.msra.mxu0 0
    %83 = vmatprep.subr.bf16.mxu0 0
    %84 = vmatpush1.bf16.msra.mxu0 0
    %85 = vmatprep.subr.bf16.mxu0 0
    %86 = vmatpush1.bf16.msra.mxu0 0
    %87 = vmatprep.subr.bf16.mxu0 0
    %88 = vmatpush1.bf16.msra.mxu0 0
    %89 = vmatprep.subr.bf16.mxu0 0
    %90 = vmatpush1.bf16.msra.mxu0 0
    %91 = vmatprep.subr.bf16.mxu0 0
    %92 = vmatpush1.bf16.msra.mxu0 0
    %93 = vmatprep.subr.bf16.mxu0 0
    %94 = vmatpush1.bf16.msra.mxu0 0
    %95 = vmatprep.subr.bf16.mxu0 0
    %96 = vmatpush1.bf16.msra.mxu0 0
    %97 = vmatprep.subr.bf16.mxu0 0
    %98 = vmatpush1.bf16.msra.mxu0 0
    %99 = vmatprep.subr.bf16.mxu0 0
    %100 = vmatpush1.bf16.msra.mxu0 0
    %101 = vmatprep.subr.bf16.mxu0 0
    %102 = vmatpush1.bf16.msra.mxu0 0
    %103 = vmatprep.subr.bf16.mxu0 0
    %104 = vmatpush1.bf16.msra.mxu0 0
    %105 = vmatprep.mubr.bf16.mxu0 0
    %106 = vmatmul.mubr.bf16.gmra.mrb[0].mxu0 %v71
    %v107 = vpop.f32.mrb[0].mxu0
    %v108 = vadd.f32 %v62, %v107
    %v109 = vpop.f32.mrb[0].mxu0
    %v110 = vpop.f32.mrb[0].mxu0
    %v111 = vpop.f32.mrb[0].mxu0
    %112 = vdwg.mxu0
    %v113 = vmax.f32 %v108, 0.0
    %v114 = vld [vmem:[#allocation4 + $0x8] sm:$0xf]
    %v115 = vld [vmem:[#allocation4 + $0xc] sm:$0xf]
    %v116 = vld [vmem:[#allocation4 + $0x10] sm:$0xf]
    %v117 = vld [vmem:[#allocation4 + $0x14] sm:$0xf]
    %v118 = vld [vmem:[#allocation4 + $0x18] sm:$0xf]
    %v119 = vld [vmem:[#allocation4 + $0x1c] sm:$0xf]
    %v120 = vld [vmem:[#allocation4 + $0x20] sm:$0xf]
    %v121 = vld [vmem:[#allocation4 + $0x24] sm:$0xf]
    %v122 = vld [vmem:[#allocation4 + $0x28] sm:$0xf]
    %v123 = vld [vmem:[#allocation4 + $0x2c] sm:$0xf]
    %v124 = vld [vmem:[#allocation4 + $0x30] sm:$0xf]
    %v125 = vld [vmem:[#allocation4 + $0x34] sm:$0xf]
    %v126 = vld [vmem:[#allocation4 + $0x38] sm:$0xf]
    %v127 = vld [vmem:[#allocation4 + $0x3c] sm:$0xf]
    %v128 = vld [vmem:[#allocation4 + $0x40] sm:$0xf]
    %v129 = vld [vmem:[#allocation4 + $0x44] sm:$0xf]
    %v130 = vld [vmem:[#allocation6 + $0x8] sm:$0x1]
    %v131 = vpack.c.bf16 %v113, %v113
    %v132 = vlaneseq
    %v133 = vshrl.u32 %v132, 7
    %v134 = vsub.s32 0, %v133
    %v135 = vrot.slane %v130, %v134
    %v152 = vunpack.c.l.b16 %v114
    %v153 = vunpack.c.l.b16 %v115
    %v154 = vunpack.c.l.b16 %v116
    %v155 = vunpack.c.l.b16 %v117
    %v156 = vunpack.c.l.b16 %v118
    %v157 = vunpack.c.l.b16 %v119
    %v158 = vunpack.c.l.b16 %v120
    %v159 = vunpack.c.l.b16 %v121
    %v160 = vunpack.c.l.b16 %v122
    %v161 = vunpack.c.l.b16 %v123
    %v162 = vunpack.c.l.b16 %v124
    %v163 = vunpack.c.l.b16 %v125
    %v164 = vunpack.c.l.b16 %v126
    %v165 = vunpack.c.l.b16 %v127
    %v166 = vunpack.c.l.b16 %v128
    %v167 = vunpack.c.l.b16 %v129
    %v168 = vpack.c.b16 %v153, %v152
    %v169 = vpack.c.b16 %v155, %v154
    %v170 = vpack.c.b16 %v157, %v156
    %v171 = vpack.c.b16 %v159, %v158
    %v172 = vpack.c.b16 %v161, %v160
    %v173 = vpack.c.b16 %v163, %v162
    %v174 = vpack.c.b16 %v165, %v164
    %v175 = vpack.c.b16 %v167, %v166
    %184 = vmatprep.subr.bf16.mxu0 0
    %185 = vmatpush1.bf16.msra.mxu0 %v168
    %186 = vmatprep.subr.bf16.mxu0 0
    %187 = vmatpush1.bf16.msra.mxu0 %v169
    %188 = vmatprep.subr.bf16.mxu0 0
    %189 = vmatpush1.bf16.msra.mxu0 %v170
    %190 = vmatprep.subr.bf16.mxu0 0
    %191 = vmatpush1.bf16.msra.mxu0 %v171
    %192 = vmatprep.subr.bf16.mxu0 0
    %193 = vmatpush1.bf16.msra.mxu0 %v172
    %194 = vmatprep.subr.bf16.mxu0 0
    %195 = vmatpush1.bf16.msra.mxu0 %v173
    %196 = vmatprep.subr.bf16.mxu0 0
    %197 = vmatpush1.bf16.msra.mxu0 %v174
    %198 = vmatprep.subr.bf16.mxu0 0
    %199 = vmatpush1.bf16.msra.mxu0 %v175
    %200 = vmatprep.subr.bf16.mxu0 0
    %201 = vmatpush1.bf16.msra.mxu0 0
    %202 = vmatprep.subr.bf16.mxu0 0
    %203 = vmatpush1.bf16.msra.mxu0 0
    %204 = vmatprep.subr.bf16.mxu0 0
    %205 = vmatpush1.bf16.msra.mxu0 0
    %206 = vmatprep.subr.bf16.mxu0 0
    %207 = vmatpush1.bf16.msra.mxu0 0
    %208 = vmatprep.subr.bf16.mxu0 0
    %209 = vmatpush1.bf16.msra.mxu0 0
    %210 = vmatprep.subr.bf16.mxu0 0
    %211 = vmatpush1.bf16.msra.mxu0 0
    %212 = vmatprep.subr.bf16.mxu0 0
    %213 = vmatpush1.bf16.msra.mxu0 0
    %214 = vmatprep.subr.bf16.mxu0 0
    %215 = vmatpush1.bf16.msra.mxu0 0
    %216 = vmatprep.mubr.bf16.mxu0 0
    %217 = vmatmul.mubr.bf16.gmra.mrb[0].mxu0 %v131
    %v218 = vpop.f32.mrb[0].mxu0
    %v219 = vadd.f32 %v135, %v218
    %v220 = vpop.f32.mrb[0].mxu0
    %v221 = vpop.f32.mrb[0].mxu0
    %v222 = vpop.f32.mrb[0].mxu0
    %223 = vdwg.mxu0
    %v224 = vmax.f32 %v219, 0.0
    %v225 = vld [vmem:[#allocation4 + $0x48] sm:$0xf]
    %v226 = vld [vmem:[#allocation4 + $0x4c] sm:$0xf]
    %v227 = vld [vmem:[#allocation4 + $0x50] sm:$0xf]
    %v228 = vld [vmem:[#allocation4 + $0x54] sm:$0xf]
    %v229 = vld [vmem:[#allocation4 + $0x58] sm:$0xf]
    %v230 = vld [vmem:[#allocation4 + $0x5c] sm:$0xf]
    %v231 = vld [vmem:[#allocation4 + $0x60] sm:$0xf]
    %v232 = vld [vmem:[#allocation4 + $0x64] sm:$0xf]
    %v233 = vld [vmem:[#allocation4 + $0x68] sm:$0xf]
    %v234 = vld [vmem:[#allocation4 + $0x6c] sm:$0xf]
    %v235 = vld [vmem:[#allocation4 + $0x70] sm:$0xf]
    %v236 = vld [vmem:[#allocation4 + $0x74] sm:$0xf]
    %v237 = vld [vmem:[#allocation4 + $0x78] sm:$0xf]
    %v238 = vld [vmem:[#allocation4 + $0x7c] sm:$0xf]
    %v239 = vld [vmem:[#allocation4 + $0x80] sm:$0xf]
    %v240 = vld [vmem:[#allocation4 + $0x84] sm:$0xf]
    %v241 = vld [vmem:[#allocation6 + $0x10] sm:$0x1]
    %v242 = vpack.c.bf16 %v224, %v224
    %v243 = vlaneseq
    %v244 = vshrl.u32 %v243, 7
    %v245 = vsub.s32 0, %v244
    %v246 = vrot.slane %v241, %v245
    %v263 = vunpack.c.l.b16 %v225
    %v264 = vunpack.c.l.b16 %v226
    %v265 = vunpack.c.l.b16 %v227
    %v266 = vunpack.c.l.b16 %v228
    %v267 = vunpack.c.l.b16 %v229
    %v268 = vunpack.c.l.b16 %v230
    %v269 = vunpack.c.l.b16 %v231
    %v270 = vunpack.c.l.b16 %v232
    %v271 = vunpack.c.l.b16 %v233
    %v272 = vunpack.c.l.b16 %v234
    %v273 = vunpack.c.l.b16 %v235
    %v274 = vunpack.c.l.b16 %v236
    %v275 = vunpack.c.l.b16 %v237
    %v276 = vunpack.c.l.b16 %v238
    %v277 = vunpack.c.l.b16 %v239
    %v278 = vunpack.c.l.b16 %v240
    %v279 = vpack.c.b16 %v264, %v263
    %v280 = vpack.c.b16 %v266, %v265
    %v281 = vpack.c.b16 %v268, %v267
    %v282 = vpack.c.b16 %v270, %v269
    %v283 = vpack.c.b16 %v272, %v271
    %v284 = vpack.c.b16 %v274, %v273
    %v285 = vpack.c.b16 %v276, %v275
    %v286 = vpack.c.b16 %v278, %v277
    %295 = vmatprep.subr.bf16.mxu0 0
    %296 = vmatpush1.bf16.msra.mxu0 %v279
    %297 = vmatprep.subr.bf16.mxu0 0
    %298 = vmatpush1.bf16.msra.mxu0 %v280
    %299 = vmatprep.subr.bf16.mxu0 0
    %300 = vmatpush1.bf16.msra.mxu0 %v281
    %301 = vmatprep.subr.bf16.mxu0 0
    %302 = vmatpush1.bf16.msra.mxu0 %v282
    %303 = vmatprep.subr.bf16.mxu0 0
    %304 = vmatpush1.bf16.msra.mxu0 %v283
    %305 = vmatprep.subr.bf16.mxu0 0
    %306 = vmatpush1.bf16.msra.mxu0 %v284
    %307 = vmatprep.subr.bf16.mxu0 0
    %308 = vmatpush1.bf16.msra.mxu0 %v285
    %309 = vmatprep.subr.bf16.mxu0 0
    %310 = vmatpush1.bf16.msra.mxu0 %v286
    %311 = vmatprep.subr.bf16.mxu0 0
    %312 = vmatpush1.bf16.msra.mxu0 0
    %313 = vmatprep.subr.bf16.mxu0 0
    %314 = vmatpush1.bf16.msra.mxu0 0
    %315 = vmatprep.subr.bf16.mxu0 0
    %316 = vmatpush1.bf16.msra.mxu0 0
    %317 = vmatprep.subr.bf16.mxu0 0
    %318 = vmatpush1.bf16.msra.mxu0 0
    %319 = vmatprep.subr.bf16.mxu0 0
    %320 = vmatpush1.bf16.msra.mxu0 0
    %321 = vmatprep.subr.bf16.mxu0 0
    %322 = vmatpush1.bf16.msra.mxu0 0
    %323 = vmatprep.subr.bf16.mxu0 0
    %324 = vmatpush1.bf16.msra.mxu0 0
    %325 = vmatprep.subr.bf16.mxu0 0
    %326 = vmatpush1.bf16.msra.mxu0 0
    %327 = vmatprep.mubr.bf16.mxu0 0
    %328 = vmatmul.mubr.bf16.gmra.mrb[0].mxu0 %v242
    %v329 = vpop.f32.mrb[0].mxu0
    %v330 = vadd.f32 %v246, %v329
    %v331 = vpop.f32.mrb[0].mxu0
    %v332 = vpop.f32.mrb[0].mxu0
    %v333 = vpop.f32.mrb[0].mxu0
    %334 = vdwg.mxu0
    %vm335 = vcmask 31744
    %336 = vst.msk [vmem:[%s3] sm:$0xff] %vm335, %v330
    // Predicated region
    $region26: #{tpu_custom_call.1} parent=1 // pred_check
      _
    $region27: #{tpu_custom_call.1} parent=1 // pred_check_branch
      %338 = sbr.rel (0) target = $region29
    $region28: #{tpu_custom_call.1} parent=1 // pred_region
      _
    $region29: #{tpu_custom_call.1} parent=1 // pred_fallthru
      _
    // Predicated region
    $region30: #{tpu_custom_call.1} parent=1 // pred_check
      _
    $region31: #{tpu_custom_call.1} parent=1 // pred_check_branch
      %340 = sbr.rel (0) target = $region33
    $region32: #{tpu_custom_call.1} parent=1 // pred_region
      _
    $region33: #{tpu_custom_call.1} parent=1 // pred_fallthru
      _
    %341 = vsyncpa [#allocation3], 1
    %342 = vsyncpa [#allocation5], 1

</llo_original>
